<compile_context>
chip_gen: v5e
topology: v5e:2x2
jax: 0.10.0
libtpu: 0.0.40
codegen_flags: <defaults>
</compile_context>

<pallas_src>
import functools

import jax
import jax.numpy as jnp
from jax.experimental import pallas as pl
from jax.experimental.pallas import tpu as pltpu


def _round_up(x, m):
    return (x + m - 1) // m * m


def _make_kernel(K, stride, Wq, inv_p):
    """Builds the fused conv + instance-norm + LeakyReLU kernel."""

    def kernel(x_ref, w_ref, b_ref, m_ref, o_ref, acc_ref):
        # x_ref  : (1, stride*stride, C_in, Q_pad)  bf16  phase-split padded input
        # w_ref  : (K*K, TCO, C_in)                 bf16  per-tap conv weights
        # b_ref  : (TCO, 1)                         f32   conv bias
        # m_ref  : (1, P_pad)                       f32   1.0 on valid output cols
        # o_ref  : (1, TCO, P_pad)                  f32   output (C_out-major, lane-dense)
        # acc_ref: (TCO, P_pad)                     f32   VMEM accumulator
        p_pad = acc_ref.shape[1]
        acc_ref[...] = jnp.zeros_like(acc_ref)

        # Lazy "im2col": 16 offset-slice matmuls accumulated in f32.
        for kh in range(K):
            for kw in range(K):
                t = kh * K + kw
                phase = (kh % stride) * stride + (kw % stride)
                start = (kh // stride) * Wq + (kw // stride)
                x_t = x_ref[0, phase, :, start:start + p_pad]     # (C_in, P_pad) bf16
                w_t = w_ref[t]                                    # (TCO, C_in)  bf16
                acc_ref[...] += jnp.dot(w_t, x_t,
                                        preferred_element_type=jnp.float32)

        y = acc_ref[...] + b_ref[...]              # (TCO, P_pad) f32
        m = m_ref[...]                             # (1, P_pad)   validity mask

        # One-pass instance-norm stats over valid spatial positions only.
        ym = y * m
        s1 = jnp.sum(ym, axis=1, keepdims=True)        # (TCO, 1)
        s2 = jnp.sum(ym * y, axis=1, keepdims=True)    # (TCO, 1)
        mean = s1 * inv_p
        var = jnp.maximum(s2 * inv_p - mean * mean, 0.0)
        y = (y - mean) * jax.lax.rsqrt(var + 1e-5)

        # LeakyReLU(0.2)
        y = jnp.maximum(y, 0.2 * y)

        o_ref[0] = y.astype(o_ref.dtype)

    return kernel


@functools.partial(jax.jit, static_argnames=("stride",))
def block_forward(x, weight, bias, stride):
    """x: (N, C_in, H, W) NCHW; weight: (C_out, C_in, 4, 4); bias: (C_out,)."""
    N, C_in, H, W = x.shape
    C_out, _, K, _ = weight.shape
    pad = 1
    s = stride

    Hp, Wp = H + 2 * pad, W + 2 * pad
    H_out = (Hp - K) // s + 1
    W_out = (Wp - K) // s + 1
    A = (K - 1) // s                      # max intra-phase tap offset
    Hq, Wq = H_out + A, W_out + A         # per-phase spatial extent used
    S2 = s * s

    p_valid = H_out * Wq                  # rows of width Wq; last (Wq-W_out) cols are junk
    P_pad = _round_up(p_valid, 128)       # lane-dense output width
    Q_pad = _round_up(A * Wq + A + P_pad, 128)

    c_in_p = _round_up(C_in, 8)

    # ---- XLA-side glue (1x data, bf16): pad channels, reflect pad, space-to-depth ----
    xb = x.astype(jnp.bfloat16)
    xb = jnp.pad(xb, ((0, 0), (0, c_in_p - C_in), (0, 0), (0, 0)))
    xp = jnp.pad(xb, ((0, 0), (0, 0), (pad, pad), (pad, pad)), mode="reflect")
    ph_extra = max(0, s * Hq - Hp)
    pw_extra = max(0, s * Wq - Wp)
    xp = jnp.pad(xp, ((0, 0), (0, 0), (0, ph_extra), (0, pw_extra)))
    xp = xp[:, :, :s * Hq, :s * Wq]
    xp = xp.reshape(N, c_in_p, Hq, s, Wq, s)
    xp = xp.transpose(0, 3, 5, 1, 2, 4)                 # (N, ph, pw, C, Hq, Wq)
    xp = xp.reshape(N, S2, c_in_p, Hq * Wq)
    xp = jnp.pad(xp, ((0, 0), (0, 0), (0, 0), (0, Q_pad - Hq * Wq)))

    # ---- output-channel tiling (keeps both v7x TensorCores busy when N == 1) ----
    c_out_p = _round_up(C_out, 8)
    tco = min(128, c_out_p)
    while c_out_p % tco != 0:
        tco -= 8
    if N * (c_out_p // tco) < 2 and tco % 16 == 0:
        tco //= 2
    n_co = c_out_p // tco

    # ---- weights / bias / validity mask ----
    wpad = jnp.pad(weight, ((0, c_out_p - C_out), (0, c_in_p - C_in), (0, 0), (0, 0)))
    w_taps = wpad.transpose(2, 3, 0, 1).reshape(K * K, c_out_p, c_in_p)
    w_taps = w_taps.astype(jnp.bfloat16)
    b_col = jnp.pad(bias, (0, c_out_p - C_out)).astype(jnp.float32).reshape(c_out_p, 1)

    pidx = jnp.arange(P_pad, dtype=jnp.int32)
    mask = ((pidx < p_valid) & (pidx % Wq < W_out)).astype(jnp.float32).reshape(1, P_pad)

    # ---- VMEM budget and cost hints ----
    est = (2 * (S2 * c_in_p * Q_pad * 2            # x block (double-buffered)
                + K * K * tco * c_in_p * 2         # weight block
                + tco * 4 + P_pad * 4              # bias + mask
                + tco * P_pad * 4)                 # output block
           + tco * P_pad * 4)                      # accumulator scratch
    vmem_limit = int(min(48 * 2**20, max(16 * 2**20, 3 * est)))
    flops = 2 * N * c_out_p * c_in_p * K * K * H_out * W_out
    bytes_accessed = int(xp.size * 2 + N * w_taps.size * 2 + N * c_out_p * P_pad * 4)

    kernel = _make_kernel(K, s, Wq, 1.0 / float(H_out * W_out))

    out = pl.pallas_call(
        kernel,
        out_shape=jax.ShapeDtypeStruct((N, c_out_p, P_pad), jnp.float32),
        grid_spec=pltpu.PrefetchScalarGridSpec(
            num_scalar_prefetch=0,
            grid=(N, n_co),
            in_specs=[
                pl.BlockSpec((1, S2, c_in_p, Q_pad), lambda n, co: (n, 0, 0, 0)),
                pl.BlockSpec((K * K, tco, c_in_p), lambda n, co: (0, co, 0)),
                pl.BlockSpec((tco, 1), lambda n, co: (co, 0)),
                pl.BlockSpec((1, P_pad), lambda n, co: (0, 0)),
            ],
            out_specs=pl.BlockSpec((1, tco, P_pad), lambda n, co: (n, co, 0)),
            scratch_shapes=[pltpu.VMEM((tco, P_pad), jnp.float32)],
        ),
        compiler_params=pltpu.CompilerParams(
            dimension_semantics=("parallel", "parallel"),
            vmem_limit_bytes=vmem_limit),
        cost_estimate=pl.CostEstimate(
            flops=flops, transcendentals=N * c_out_p,
            bytes_accessed=bytes_accessed),
    )(xp, w_taps, b_col, mask)

    # Strip channel padding and junk columns; NCHW falls out with no transpose.
    y = out[:, :C_out, :p_valid].reshape(N, C_out, H_out, Wq)[:, :, :, :W_out]
    return y


def _reference(x, weight, bias, stride):
    """Pure-JAX reference (same bf16-rounded operands as the kernel path)."""
    xb = x.astype(jnp.bfloat16).astype(jnp.float32)
    wb = weight.astype(jnp.bfloat16).astype(jnp.float32)
    xp = jnp.pad(xb, ((0, 0), (0, 0), (1, 1), (1, 1)), mode="reflect")
    y = jax.lax.conv_general_dilated(
        xp, wb, window_strides=(stride, stride), padding="VALID",
        dimension_numbers=("NCHW", "OIHW", "NCHW"),
        precision=jax.lax.Precision.HIGHEST)
    y = y + bias.astype(jnp.float32)[None, :, None, None]
    mean = y.mean(axis=(2, 3), keepdims=True)
    var = jnp.mean((y - mean) ** 2, axis=(2, 3), keepdims=True)
    y = (y - mean) * jax.lax.rsqrt(var + 1e-5)
    return jnp.where(y > 0, y, 0.2 * y)


if __name__ == "__main__":
    # Small deterministic setup consistent with Block(in_channels=4, out_channels=8, stride=2)
    N, C_in, H, W = 2, 4, 16, 16
    C_out, K, stride = 8, 4, 2

    key = jax.random.PRNGKey(0)
    kx, kw, kb = jax.random.split(key, 3)
    x = jax.random.normal(kx, (N, C_in, H, W), dtype=jnp.float32)
    weight = jax.random.normal(kw, (C_out, C_in, K, K), dtype=jnp.float32) * 0.05
    bias = jax.random.normal(kb, (C_out,), dtype=jnp.float32) * 0.05

    y = block_forward(x, weight, bias, stride)
    jax.block_until_ready(y)
    assert y.shape == (N, C_out, H // stride, W // stride), y.shape

    y_ref = _reference(x, weight, bias, stride)
    err = float(jnp.max(jnp.abs(y - y_ref)))
    assert err < 3e-2, f"max abs error vs reference: {err}"
    print("KERNEL_OK")
</pallas_src>

<mosaic_0001>
module attributes {stable_mosaic.version = 11 : i64} {
  func.func @kernel(%arg0: i32, %arg1: i32, %arg2: memref<1x4x8x256xbf16, #tpu.memory_space<vmem>>, %arg3: memref<16x8x8xbf16, #tpu.memory_space<vmem>>, %arg4: memref<8x1xf32, #tpu.memory_space<vmem>>, %arg5: memref<1x128xf32, #tpu.memory_space<vmem>>, %arg6: memref<1x8x128xf32, #tpu.memory_space<vmem>>, %arg7: memref<8x128xf32, #tpu.memory_space<vmem>>) attributes {dimension_semantics = [#tpu.dimension_semantics<parallel>, #tpu.dimension_semantics<parallel>], iteration_bounds = array<i64: 2, 1>, scalar_prefetch = 0 : i64, scratch_operands = 1 : i64, tpu.core_type = #tpu.core_type<tc>, window_params = [{transform_indices = @transform_0, window_bounds = array<i64: 1, 4, 8, 256>}, {transform_indices = @transform_1, window_bounds = array<i64: 16, 8, 8>}, {transform_indices = @transform_2, window_bounds = array<i64: 8, 1>}, {pipeline_mode = #tpu.pipeline_mode<synchronous>, transform_indices = @transform_3, window_bounds = array<i64: 1, 128>}, {transform_indices = @transform_4, window_bounds = array<i64: 1, 8, 128>}]} {
    %cst = arith.constant 0.000000e+00 : f32
    %0 = vector.broadcast %cst : f32 to vector<8x128xf32>
    %c0 = arith.constant 0 : index
    %c0_0 = arith.constant 0 : index
    %1 = vector.load %arg7[%c0, %c0_0] : memref<8x128xf32, #tpu.memory_space<vmem>>, vector<8x128xf32>
    tpu.vector_store %arg7[%c0, %c0_0], %0 {strides = array<i32>} : memref<8x128xf32, #tpu.memory_space<vmem>>, vector<8x128xf32>,
    %c0_1 = arith.constant 0 : index
    %c0_2 = arith.constant 0 : index
    %c0_3 = arith.constant 0 : index
    %c0_4 = arith.constant 0 : index
    %2 = vector.load %arg2[%c0_1, %c0_2, %c0_3, %c0_4] : memref<1x4x8x256xbf16, #tpu.memory_space<vmem>>, vector<1x1x8x128xbf16>
    %3 = vector.shape_cast %2 : vector<1x1x8x128xbf16> to vector<8x128xbf16>
    %c0_5 = arith.constant 0 : index
    %c0_6 = arith.constant 0 : index
    %c0_7 = arith.constant 0 : index
    %4 = vector.load %arg3[%c0_5, %c0_6, %c0_7] : memref<16x8x8xbf16, #tpu.memory_space<vmem>>, vector<1x8x8xbf16>
    %5 = vector.shape_cast %4 : vector<1x8x8xbf16> to vector<8x8xbf16>
    %c0_8 = arith.constant 0 : index
    %c0_9 = arith.constant 0 : index
    %6 = vector.load %arg7[%c0_8, %c0_9] : memref<8x128xf32, #tpu.memory_space<vmem>>, vector<8x128xf32>
    %cst_10 = arith.constant dense<0.000000e+00> : vector<8x128xf32>
    %7 = tpu.matmul %5, %3, %cst_10 {dimension_numbers = #tpu.dot_dimension_numbers<[1], [0], [0], [1], [0, 0, 1, 1], [], []>} : vector<8x8xbf16>, vector<8x128xbf16>, vector<8x128xf32> -> vector<8x128xf32>
    %8 = arith.addf %6, %7 : vector<8x128xf32>
    %c0_11 = arith.constant 0 : index
    %c0_12 = arith.constant 0 : index
    %9 = vector.load %arg7[%c0_11, %c0_12] : memref<8x128xf32, #tpu.memory_space<vmem>>, vector<8x128xf32>
    tpu.vector_store %arg7[%c0_11, %c0_12], %8 {strides = array<i32>} : memref<8x128xf32, #tpu.memory_space<vmem>>, vector<8x128xf32>,
    %c0_13 = arith.constant 0 : index
    %c1 = arith.constant 1 : index
    %c0_14 = arith.constant 0 : index
    %c0_15 = arith.constant 0 : index
    %10 = vector.load %arg2[%c0_13, %c1, %c0_14, %c0_15] : memref<1x4x8x256xbf16, #tpu.memory_space<vmem>>, vector<1x1x8x128xbf16>
    %11 = vector.shape_cast %10 : vector<1x1x8x128xbf16> to vector<8x128xbf16>
    %c1_16 = arith.constant 1 : index
    %c0_17 = arith.constant 0 : index
    %c0_18 = arith.constant 0 : index
    %12 = vector.load %arg3[%c1_16, %c0_17, %c0_18] : memref<16x8x8xbf16, #tpu.memory_space<vmem>>, vector<1x8x8xbf16>
    %13 = vector.shape_cast %12 : vector<1x8x8xbf16> to vector<8x8xbf16>
    %c0_19 = arith.constant 0 : index
    %c0_20 = arith.constant 0 : index
    %14 = vector.load %arg7[%c0_19, %c0_20] : memref<8x128xf32, #tpu.memory_space<vmem>>, vector<8x128xf32>
    %cst_21 = arith.constant dense<0.000000e+00> : vector<8x128xf32>
    %15 = tpu.matmul %13, %11, %cst_21 {dimension_numbers = #tpu.dot_dimension_numbers<[1], [0], [0], [1], [0, 0, 1, 1], [], []>} : vector<8x8xbf16>, vector<8x128xbf16>, vector<8x128xf32> -> vector<8x128xf32>
    %16 = arith.addf %14, %15 : vector<8x128xf32>
    %c0_22 = arith.constant 0 : index
    %c0_23 = arith.constant 0 : index
    %17 = vector.load %arg7[%c0_22, %c0_23] : memref<8x128xf32, #tpu.memory_space<vmem>>, vector<8x128xf32>
    tpu.vector_store %arg7[%c0_22, %c0_23], %16 {strides = array<i32>} : memref<8x128xf32, #tpu.memory_space<vmem>>, vector<8x128xf32>,
    %c0_24 = arith.constant 0 : index
    %c0_25 = arith.constant 0 : index
    %c0_26 = arith.constant 0 : index
    %c1_27 = arith.constant 1 : index
    %18 = vector.load %arg2[%c0_24, %c0_25, %c0_26, %c1_27] : memref<1x4x8x256xbf16, #tpu.memory_space<vmem>>, vector<1x1x8x128xbf16>
    %19 = vector.shape_cast %18 : vector<1x1x8x128xbf16> to vector<8x128xbf16>
    %c2 = arith.constant 2 : index
    %c0_28 = arith.constant 0 : index
    %c0_29 = arith.constant 0 : index
    %20 = vector.load %arg3[%c2, %c0_28, %c0_29] : memref<16x8x8xbf16, #tpu.memory_space<vmem>>, vector<1x8x8xbf16>
    %21 = vector.shape_cast %20 : vector<1x8x8xbf16> to vector<8x8xbf16>
    %c0_30 = arith.constant 0 : index
    %c0_31 = arith.constant 0 : index
    %22 = vector.load %arg7[%c0_30, %c0_31] : memref<8x128xf32, #tpu.memory_space<vmem>>, vector<8x128xf32>
    %cst_32 = arith.constant dense<0.000000e+00> : vector<8x128xf32>
    %23 = tpu.matmul %21, %19, %cst_32 {dimension_numbers = #tpu.dot_dimension_numbers<[1], [0], [0], [1], [0, 0, 1, 1], [], []>} : vector<8x8xbf16>, vector<8x128xbf16>, vector<8x128xf32> -> vector<8x128xf32>
    %24 = arith.addf %22, %23 : vector<8x128xf32>
    %c0_33 = arith.constant 0 : index
    %c0_34 = arith.constant 0 : index
    %25 = vector.load %arg7[%c0_33, %c0_34] : memref<8x128xf32, #tpu.memory_space<vmem>>, vector<8x128xf32>
    tpu.vector_store %arg7[%c0_33, %c0_34], %24 {strides = array<i32>} : memref<8x128xf32, #tpu.memory_space<vmem>>, vector<8x128xf32>,
    %c0_35 = arith.constant 0 : index
    %c1_36 = arith.constant 1 : index
    %c0_37 = arith.constant 0 : index
    %c1_38 = arith.constant 1 : index
    %26 = vector.load %arg2[%c0_35, %c1_36, %c0_37, %c1_38] : memref<1x4x8x256xbf16, #tpu.memory_space<vmem>>, vector<1x1x8x128xbf16>
    %27 = vector.shape_cast %26 : vector<1x1x8x128xbf16> to vector<8x128xbf16>
    %c3 = arith.constant 3 : index
    %c0_39 = arith.constant 0 : index
    %c0_40 = arith.constant 0 : index
    %28 = vector.load %arg3[%c3, %c0_39, %c0_40] : memref<16x8x8xbf16, #tpu.memory_space<vmem>>, vector<1x8x8xbf16>
    %29 = vector.shape_cast %28 : vector<1x8x8xbf16> to vector<8x8xbf16>
    %c0_41 = arith.constant 0 : index
    %c0_42 = arith.constant 0 : index
    %30 = vector.load %arg7[%c0_41, %c0_42] : memref<8x128xf32, #tpu.memory_space<vmem>>, vector<8x128xf32>
    %cst_43 = arith.constant dense<0.000000e+00> : vector<8x128xf32>
    %31 = tpu.matmul %29, %27, %cst_43 {dimension_numbers = #tpu.dot_dimension_numbers<[1], [0], [0], [1], [0, 0, 1, 1], [], []>} : vector<8x8xbf16>, vector<8x128xbf16>, vector<8x128xf32> -> vector<8x128xf32>
    %32 = arith.addf %30, %31 : vector<8x128xf32>
    %c0_44 = arith.constant 0 : index
    %c0_45 = arith.constant 0 : index
    %33 = vector.load %arg7[%c0_44, %c0_45] : memref<8x128xf32, #tpu.memory_space<vmem>>, vector<8x128xf32>
    tpu.vector_store %arg7[%c0_44, %c0_45], %32 {strides = array<i32>} : memref<8x128xf32, #tpu.memory_space<vmem>>, vector<8x128xf32>,
    %c0_46 = arith.constant 0 : index
    %c2_47 = arith.constant 2 : index
    %c0_48 = arith.constant 0 : index
    %c0_49 = arith.constant 0 : index
    %34 = vector.load %arg2[%c0_46, %c2_47, %c0_48, %c0_49] : memref<1x4x8x256xbf16, #tpu.memory_space<vmem>>, vector<1x1x8x128xbf16>
    %35 = vector.shape_cast %34 : vector<1x1x8x128xbf16> to vector<8x128xbf16>
    %c4 = arith.constant 4 : index
    %c0_50 = arith.constant 0 : index
    %c0_51 = arith.constant 0 : index
    %36 = vector.load %arg3[%c4, %c0_50, %c0_51] : memref<16x8x8xbf16, #tpu.memory_space<vmem>>, vector<1x8x8xbf16>
    %37 = vector.shape_cast %36 : vector<1x8x8xbf16> to vector<8x8xbf16>
    %c0_52 = arith.constant 0 : index
    %c0_53 = arith.constant 0 : index
    %38 = vector.load %arg7[%c0_52, %c0_53] : memref<8x128xf32, #tpu.memory_space<vmem>>, vector<8x128xf32>
    %cst_54 = arith.constant dense<0.000000e+00> : vector<8x128xf32>
    %39 = tpu.matmul %37, %35, %cst_54 {dimension_numbers = #tpu.dot_dimension_numbers<[1], [0], [0], [1], [0, 0, 1, 1], [], []>} : vector<8x8xbf16>, vector<8x128xbf16>, vector<8x128xf32> -> vector<8x128xf32>
    %40 = arith.addf %38, %39 : vector<8x128xf32>
    %c0_55 = arith.constant 0 : index
    %c0_56 = arith.constant 0 : index
    %41 = vector.load %arg7[%c0_55, %c0_56] : memref<8x128xf32, #tpu.memory_space<vmem>>, vector<8x128xf32>
    tpu.vector_store %arg7[%c0_55, %c0_56], %40 {strides = array<i32>} : memref<8x128xf32, #tpu.memory_space<vmem>>, vector<8x128xf32>,
    %c0_57 = arith.constant 0 : index
    %c3_58 = arith.constant 3 : index
    %c0_59 = arith.constant 0 : index
    %c0_60 = arith.constant 0 : index
    %42 = vector.load %arg2[%c0_57, %c3_58, %c0_59, %c0_60] : memref<1x4x8x256xbf16, #tpu.memory_space<vmem>>, vector<1x1x8x128xbf16>
    %43 = vector.shape_cast %42 : vector<1x1x8x128xbf16> to vector<8x128xbf16>
    %c5 = arith.constant 5 : index
    %c0_61 = arith.constant 0 : index
    %c0_62 = arith.constant 0 : index
    %44 = vector.load %arg3[%c5, %c0_61, %c0_62] : memref<16x8x8xbf16, #tpu.memory_space<vmem>>, vector<1x8x8xbf16>
    %45 = vector.shape_cast %44 : vector<1x8x8xbf16> to vector<8x8xbf16>
    %c0_63 = arith.constant 0 : index
    %c0_64 = arith.constant 0 : index
    %46 = vector.load %arg7[%c0_63, %c0_64] : memref<8x128xf32, #tpu.memory_space<vmem>>, vector<8x128xf32>
    %cst_65 = arith.constant dense<0.000000e+00> : vector<8x128xf32>
    %47 = tpu.matmul %45, %43, %cst_65 {dimension_numbers = #tpu.dot_dimension_numbers<[1], [0], [0], [1], [0, 0, 1, 1], [], []>} : vector<8x8xbf16>, vector<8x128xbf16>, vector<8x128xf32> -> vector<8x128xf32>
    %48 = arith.addf %46, %47 : vector<8x128xf32>
    %c0_66 = arith.constant 0 : index
    %c0_67 = arith.constant 0 : index
    %49 = vector.load %arg7[%c0_66, %c0_67] : memref<8x128xf32, #tpu.memory_space<vmem>>, vector<8x128xf32>
    tpu.vector_store %arg7[%c0_66, %c0_67], %48 {strides = array<i32>} : memref<8x128xf32, #tpu.memory_space<vmem>>, vector<8x128xf32>,
    %c0_68 = arith.constant 0 : index
    %c2_69 = arith.constant 2 : index
    %c0_70 = arith.constant 0 : index
    %c1_71 = arith.constant 1 : index
    %50 = vector.load %arg2[%c0_68, %c2_69, %c0_70, %c1_71] : memref<1x4x8x256xbf16, #tpu.memory_space<vmem>>, vector<1x1x8x128xbf16>
    %51 = vector.shape_cast %50 : vector<1x1x8x128xbf16> to vector<8x128xbf16>
    %c6 = arith.constant 6 : index
    %c0_72 = arith.constant 0 : index
    %c0_73 = arith.constant 0 : index
    %52 = vector.load %arg3[%c6, %c0_72, %c0_73] : memref<16x8x8xbf16, #tpu.memory_space<vmem>>, vector<1x8x8xbf16>
    %53 = vector.shape_cast %52 : vector<1x8x8xbf16> to vector<8x8xbf16>
    %c0_74 = arith.constant 0 : index
    %c0_75 = arith.constant 0 : index
    %54 = vector.load %arg7[%c0_74, %c0_75] : memref<8x128xf32, #tpu.memory_space<vmem>>, vector<8x128xf32>
    %cst_76 = arith.constant dense<0.000000e+00> : vector<8x128xf32>
    %55 = tpu.matmul %53, %51, %cst_76 {dimension_numbers = #tpu.dot_dimension_numbers<[1], [0], [0], [1], [0, 0, 1, 1], [], []>} : vector<8x8xbf16>, vector<8x128xbf16>, vector<8x128xf32> -> vector<8x128xf32>
    %56 = arith.addf %54, %55 : vector<8x128xf32>
    %c0_77 = arith.constant 0 : index
    %c0_78 = arith.constant 0 : index
    %57 = vector.load %arg7[%c0_77, %c0_78] : memref<8x128xf32, #tpu.memory_space<vmem>>, vector<8x128xf32>
    tpu.vector_store %arg7[%c0_77, %c0_78], %56 {strides = array<i32>} : memref<8x128xf32, #tpu.memory_space<vmem>>, vector<8x128xf32>,
    %c0_79 = arith.constant 0 : index
    %c3_80 = arith.constant 3 : index
    %c0_81 = arith.constant 0 : index
    %c1_82 = arith.constant 1 : index
    %58 = vector.load %arg2[%c0_79, %c3_80, %c0_81, %c1_82] : memref<1x4x8x256xbf16, #tpu.memory_space<vmem>>, vector<1x1x8x128xbf16>
    %59 = vector.shape_cast %58 : vector<1x1x8x128xbf16> to vector<8x128xbf16>
    %c7 = arith.constant 7 : index
    %c0_83 = arith.constant 0 : index
    %c0_84 = arith.constant 0 : index
    %60 = vector.load %arg3[%c7, %c0_83, %c0_84] : memref<16x8x8xbf16, #tpu.memory_space<vmem>>, vector<1x8x8xbf16>
    %61 = vector.shape_cast %60 : vector<1x8x8xbf16> to vector<8x8xbf16>
    %c0_85 = arith.constant 0 : index
    %c0_86 = arith.constant 0 : index
    %62 = vector.load %arg7[%c0_85, %c0_86] : memref<8x128xf32, #tpu.memory_space<vmem>>, vector<8x128xf32>
    %cst_87 = arith.constant dense<0.000000e+00> : vector<8x128xf32>
    %63 = tpu.matmul %61, %59, %cst_87 {dimension_numbers = #tpu.dot_dimension_numbers<[1], [0], [0], [1], [0, 0, 1, 1], [], []>} : vector<8x8xbf16>, vector<8x128xbf16>, vector<8x128xf32> -> vector<8x128xf32>
    %64 = arith.addf %62, %63 : vector<8x128xf32>
    %c0_88 = arith.constant 0 : index
    %c0_89 = arith.constant 0 : index
    %65 = vector.load %arg7[%c0_88, %c0_89] : memref<8x128xf32, #tpu.memory_space<vmem>>, vector<8x128xf32>
    tpu.vector_store %arg7[%c0_88, %c0_89], %64 {strides = array<i32>} : memref<8x128xf32, #tpu.memory_space<vmem>>, vector<8x128xf32>,
    %c0_90 = arith.constant 0 : index
    %c0_91 = arith.constant 0 : index
    %c0_92 = arith.constant 0 : index
    %c9 = arith.constant 9 : index
    %66 = vector.load %arg2[%c0_90, %c0_91, %c0_92, %c9] : memref<1x4x8x256xbf16, #tpu.memory_space<vmem>>, vector<1x1x8x128xbf16>
    %67 = vector.shape_cast %66 : vector<1x1x8x128xbf16> to vector<8x128xbf16>
    %c8 = arith.constant 8 : index
    %c0_93 = arith.constant 0 : index
    %c0_94 = arith.constant 0 : index
    %68 = vector.load %arg3[%c8, %c0_93, %c0_94] : memref<16x8x8xbf16, #tpu.memory_space<vmem>>, vector<1x8x8xbf16>
    %69 = vector.shape_cast %68 : vector<1x8x8xbf16> to vector<8x8xbf16>
    %c0_95 = arith.constant 0 : index
    %c0_96 = arith.constant 0 : index
    %70 = vector.load %arg7[%c0_95, %c0_96] : memref<8x128xf32, #tpu.memory_space<vmem>>, vector<8x128xf32>
    %cst_97 = arith.constant dense<0.000000e+00> : vector<8x128xf32>
    %71 = tpu.matmul %69, %67, %cst_97 {dimension_numbers = #tpu.dot_dimension_numbers<[1], [0], [0], [1], [0, 0, 1, 1], [], []>} : vector<8x8xbf16>, vector<8x128xbf16>, vector<8x128xf32> -> vector<8x128xf32>
    %72 = arith.addf %70, %71 : vector<8x128xf32>
    %c0_98 = arith.constant 0 : index
    %c0_99 = arith.constant 0 : index
    %73 = vector.load %arg7[%c0_98, %c0_99] : memref<8x128xf32, #tpu.memory_space<vmem>>, vector<8x128xf32>
    tpu.vector_store %arg7[%c0_98, %c0_99], %72 {strides = array<i32>} : memref<8x128xf32, #tpu.memory_space<vmem>>, vector<8x128xf32>,
    %c0_100 = arith.constant 0 : index
    %c1_101 = arith.constant 1 : index
    %c0_102 = arith.constant 0 : index
    %c9_103 = arith.constant 9 : index
    %74 = vector.load %arg2[%c0_100, %c1_101, %c0_102, %c9_103] : memref<1x4x8x256xbf16, #tpu.memory_space<vmem>>, vector<1x1x8x128xbf16>
    %75 = vector.shape_cast %74 : vector<1x1x8x128xbf16> to vector<8x128xbf16>
    %c9_104 = arith.constant 9 : index
    %c0_105 = arith.constant 0 : index
    %c0_106 = arith.constant 0 : index
    %76 = vector.load %arg3[%c9_104, %c0_105, %c0_106] : memref<16x8x8xbf16, #tpu.memory_space<vmem>>, vector<1x8x8xbf16>
    %77 = vector.shape_cast %76 : vector<1x8x8xbf16> to vector<8x8xbf16>
    %c0_107 = arith.constant 0 : index
    %c0_108 = arith.constant 0 : index
    %78 = vector.load %arg7[%c0_107, %c0_108] : memref<8x128xf32, #tpu.memory_space<vmem>>, vector<8x128xf32>
    %cst_109 = arith.constant dense<0.000000e+00> : vector<8x128xf32>
    %79 = tpu.matmul %77, %75, %cst_109 {dimension_numbers = #tpu.dot_dimension_numbers<[1], [0], [0], [1], [0, 0, 1, 1], [], []>} : vector<8x8xbf16>, vector<8x128xbf16>, vector<8x128xf32> -> vector<8x128xf32>
    %80 = arith.addf %78, %79 : vector<8x128xf32>
    %c0_110 = arith.constant 0 : index
    %c0_111 = arith.constant 0 : index
    %81 = vector.load %arg7[%c0_110, %c0_111] : memref<8x128xf32, #tpu.memory_space<vmem>>, vector<8x128xf32>
    tpu.vector_store %arg7[%c0_110, %c0_111], %80 {strides = array<i32>} : memref<8x128xf32, #tpu.memory_space<vmem>>, vector<8x128xf32>,
    %c0_112 = arith.constant 0 : index
    %c0_113 = arith.constant 0 : index
    %c0_114 = arith.constant 0 : index
    %c10 = arith.constant 10 : index
    %82 = vector.load %arg2[%c0_112, %c0_113, %c0_114, %c10] : memref<1x4x8x256xbf16, #tpu.memory_space<vmem>>, vector<1x1x8x128xbf16>
    %83 = vector.shape_cast %82 : vector<1x1x8x128xbf16> to vector<8x128xbf16>
    %c10_115 = arith.constant 10 : index
    %c0_116 = arith.constant 0 : index
    %c0_117 = arith.constant 0 : index
    %84 = vector.load %arg3[%c10_115, %c0_116, %c0_117] : memref<16x8x8xbf16, #tpu.memory_space<vmem>>, vector<1x8x8xbf16>
    %85 = vector.shape_cast %84 : vector<1x8x8xbf16> to vector<8x8xbf16>
    %c0_118 = arith.constant 0 : index
    %c0_119 = arith.constant 0 : index
    %86 = vector.load %arg7[%c0_118, %c0_119] : memref<8x128xf32, #tpu.memory_space<vmem>>, vector<8x128xf32>
    %cst_120 = arith.constant dense<0.000000e+00> : vector<8x128xf32>
    %87 = tpu.matmul %85, %83, %cst_120 {dimension_numbers = #tpu.dot_dimension_numbers<[1], [0], [0], [1], [0, 0, 1, 1], [], []>} : vector<8x8xbf16>, vector<8x128xbf16>, vector<8x128xf32> -> vector<8x128xf32>
    %88 = arith.addf %86, %87 : vector<8x128xf32>
    %c0_121 = arith.constant 0 : index
    %c0_122 = arith.constant 0 : index
    %89 = vector.load %arg7[%c0_121, %c0_122] : memref<8x128xf32, #tpu.memory_space<vmem>>, vector<8x128xf32>
    tpu.vector_store %arg7[%c0_121, %c0_122], %88 {strides = array<i32>} : memref<8x128xf32, #tpu.memory_space<vmem>>, vector<8x128xf32>,
    %c0_123 = arith.constant 0 : index
    %c1_124 = arith.constant 1 : index
    %c0_125 = arith.constant 0 : index
    %c10_126 = arith.constant 10 : index
    %90 = vector.load %arg2[%c0_123, %c1_124, %c0_125, %c10_126] : memref<1x4x8x256xbf16, #tpu.memory_space<vmem>>, vector<1x1x8x128xbf16>
    %91 = vector.shape_cast %90 : vector<1x1x8x128xbf16> to vector<8x128xbf16>
    %c11 = arith.constant 11 : index
    %c0_127 = arith.constant 0 : index
    %c0_128 = arith.constant 0 : index
    %92 = vector.load %arg3[%c11, %c0_127, %c0_128] : memref<16x8x8xbf16, #tpu.memory_space<vmem>>, vector<1x8x8xbf16>
    %93 = vector.shape_cast %92 : vector<1x8x8xbf16> to vector<8x8xbf16>
    %c0_129 = arith.constant 0 : index
    %c0_130 = arith.constant 0 : index
    %94 = vector.load %arg7[%c0_129, %c0_130] : memref<8x128xf32, #tpu.memory_space<vmem>>, vector<8x128xf32>
    %cst_131 = arith.constant dense<0.000000e+00> : vector<8x128xf32>
    %95 = tpu.matmul %93, %91, %cst_131 {dimension_numbers = #tpu.dot_dimension_numbers<[1], [0], [0], [1], [0, 0, 1, 1], [], []>} : vector<8x8xbf16>, vector<8x128xbf16>, vector<8x128xf32> -> vector<8x128xf32>
    %96 = arith.addf %94, %95 : vector<8x128xf32>
    %c0_132 = arith.constant 0 : index
    %c0_133 = arith.constant 0 : index
    %97 = vector.load %arg7[%c0_132, %c0_133] : memref<8x128xf32, #tpu.memory_space<vmem>>, vector<8x128xf32>
    tpu.vector_store %arg7[%c0_132, %c0_133], %96 {strides = array<i32>} : memref<8x128xf32, #tpu.memory_space<vmem>>, vector<8x128xf32>,
    %c0_134 = arith.constant 0 : index
    %c2_135 = arith.constant 2 : index
    %c0_136 = arith.constant 0 : index
    %c9_137 = arith.constant 9 : index
    %98 = vector.load %arg2[%c0_134, %c2_135, %c0_136, %c9_137] : memref<1x4x8x256xbf16, #tpu.memory_space<vmem>>, vector<1x1x8x128xbf16>
    %99 = vector.shape_cast %98 : vector<1x1x8x128xbf16> to vector<8x128xbf16>
    %c12 = arith.constant 12 : index
    %c0_138 = arith.constant 0 : index
    %c0_139 = arith.constant 0 : index
    %100 = vector.load %arg3[%c12, %c0_138, %c0_139] : memref<16x8x8xbf16, #tpu.memory_space<vmem>>, vector<1x8x8xbf16>
    %101 = vector.shape_cast %100 : vector<1x8x8xbf16> to vector<8x8xbf16>
    %c0_140 = arith.constant 0 : index
    %c0_141 = arith.constant 0 : index
    %102 = vector.load %arg7[%c0_140, %c0_141] : memref<8x128xf32, #tpu.memory_space<vmem>>, vector<8x128xf32>
    %cst_142 = arith.constant dense<0.000000e+00> : vector<8x128xf32>
    %103 = tpu.matmul %101, %99, %cst_142 {dimension_numbers = #tpu.dot_dimension_numbers<[1], [0], [0], [1], [0, 0, 1, 1], [], []>} : vector<8x8xbf16>, vector<8x128xbf16>, vector<8x128xf32> -> vector<8x128xf32>
    %104 = arith.addf %102, %103 : vector<8x128xf32>
    %c0_143 = arith.constant 0 : index
    %c0_144 = arith.constant 0 : index
    %105 = vector.load %arg7[%c0_143, %c0_144] : memref<8x128xf32, #tpu.memory_space<vmem>>, vector<8x128xf32>
    tpu.vector_store %arg7[%c0_143, %c0_144], %104 {strides = array<i32>} : memref<8x128xf32, #tpu.memory_space<vmem>>, vector<8x128xf32>,
    %c0_145 = arith.constant 0 : index
    %c3_146 = arith.constant 3 : index
    %c0_147 = arith.constant 0 : index
    %c9_148 = arith.constant 9 : index
    %106 = vector.load %arg2[%c0_145, %c3_146, %c0_147, %c9_148] : memref<1x4x8x256xbf16, #tpu.memory_space<vmem>>, vector<1x1x8x128xbf16>
    %107 = vector.shape_cast %106 : vector<1x1x8x128xbf16> to vector<8x128xbf16>
    %c13 = arith.constant 13 : index
    %c0_149 = arith.constant 0 : index
    %c0_150 = arith.constant 0 : index
    %108 = vector.load %arg3[%c13, %c0_149, %c0_150] : memref<16x8x8xbf16, #tpu.memory_space<vmem>>, vector<1x8x8xbf16>
    %109 = vector.shape_cast %108 : vector<1x8x8xbf16> to vector<8x8xbf16>
    %c0_151 = arith.constant 0 : index
    %c0_152 = arith.constant 0 : index
    %110 = vector.load %arg7[%c0_151, %c0_152] : memref<8x128xf32, #tpu.memory_space<vmem>>, vector<8x128xf32>
    %cst_153 = arith.constant dense<0.000000e+00> : vector<8x128xf32>
    %111 = tpu.matmul %109, %107, %cst_153 {dimension_numbers = #tpu.dot_dimension_numbers<[1], [0], [0], [1], [0, 0, 1, 1], [], []>} : vector<8x8xbf16>, vector<8x128xbf16>, vector<8x128xf32> -> vector<8x128xf32>
    %112 = arith.addf %110, %111 : vector<8x128xf32>
    %c0_154 = arith.constant 0 : index
    %c0_155 = arith.constant 0 : index
    %113 = vector.load %arg7[%c0_154, %c0_155] : memref<8x128xf32, #tpu.memory_space<vmem>>, vector<8x128xf32>
    tpu.vector_store %arg7[%c0_154, %c0_155], %112 {strides = array<i32>} : memref<8x128xf32, #tpu.memory_space<vmem>>, vector<8x128xf32>,
    %c0_156 = arith.constant 0 : index
    %c2_157 = arith.constant 2 : index
    %c0_158 = arith.constant 0 : index
    %c10_159 = arith.constant 10 : index
    %114 = vector.load %arg2[%c0_156, %c2_157, %c0_158, %c10_159] : memref<1x4x8x256xbf16, #tpu.memory_space<vmem>>, vector<1x1x8x128xbf16>
    %115 = vector.shape_cast %114 : vector<1x1x8x128xbf16> to vector<8x128xbf16>
    %c14 = arith.constant 14 : index
    %c0_160 = arith.constant 0 : index
    %c0_161 = arith.constant 0 : index
    %116 = vector.load %arg3[%c14, %c0_160, %c0_161] : memref<16x8x8xbf16, #tpu.memory_space<vmem>>, vector<1x8x8xbf16>
    %117 = vector.shape_cast %116 : vector<1x8x8xbf16> to vector<8x8xbf16>
    %c0_162 = arith.constant 0 : index
    %c0_163 = arith.constant 0 : index
    %118 = vector.load %arg7[%c0_162, %c0_163] : memref<8x128xf32, #tpu.memory_space<vmem>>, vector<8x128xf32>
    %cst_164 = arith.constant dense<0.000000e+00> : vector<8x128xf32>
    %119 = tpu.matmul %117, %115, %cst_164 {dimension_numbers = #tpu.dot_dimension_numbers<[1], [0], [0], [1], [0, 0, 1, 1], [], []>} : vector<8x8xbf16>, vector<8x128xbf16>, vector<8x128xf32> -> vector<8x128xf32>
    %120 = arith.addf %118, %119 : vector<8x128xf32>
    %c0_165 = arith.constant 0 : index
    %c0_166 = arith.constant 0 : index
    %121 = vector.load %arg7[%c0_165, %c0_166] : memref<8x128xf32, #tpu.memory_space<vmem>>, vector<8x128xf32>
    tpu.vector_store %arg7[%c0_165, %c0_166], %120 {strides = array<i32>} : memref<8x128xf32, #tpu.memory_space<vmem>>, vector<8x128xf32>,
    %c0_167 = arith.constant 0 : index
    %c3_168 = arith.constant 3 : index
    %c0_169 = arith.constant 0 : index
    %c10_170 = arith.constant 10 : index
    %122 = vector.load %arg2[%c0_167, %c3_168, %c0_169, %c10_170] : memref<1x4x8x256xbf16, #tpu.memory_space<vmem>>, vector<1x1x8x128xbf16>
    %123 = vector.shape_cast %122 : vector<1x1x8x128xbf16> to vector<8x128xbf16>
    %c15 = arith.constant 15 : index
    %c0_171 = arith.constant 0 : index
    %c0_172 = arith.constant 0 : index
    %124 = vector.load %arg3[%c15, %c0_171, %c0_172] : memref<16x8x8xbf16, #tpu.memory_space<vmem>>, vector<1x8x8xbf16>
    %125 = vector.shape_cast %124 : vector<1x8x8xbf16> to vector<8x8xbf16>
    %c0_173 = arith.constant 0 : index
    %c0_174 = arith.constant 0 : index
    %126 = vector.load %arg7[%c0_173, %c0_174] : memref<8x128xf32, #tpu.memory_space<vmem>>, vector<8x128xf32>
    %cst_175 = arith.constant dense<0.000000e+00> : vector<8x128xf32>
    %127 = tpu.matmul %125, %123, %cst_175 {dimension_numbers = #tpu.dot_dimension_numbers<[1], [0], [0], [1], [0, 0, 1, 1], [], []>} : vector<8x8xbf16>, vector<8x128xbf16>, vector<8x128xf32> -> vector<8x128xf32>
    %128 = arith.addf %126, %127 : vector<8x128xf32>
    %c0_176 = arith.constant 0 : index
    %c0_177 = arith.constant 0 : index
    %129 = vector.load %arg7[%c0_176, %c0_177] : memref<8x128xf32, #tpu.memory_space<vmem>>, vector<8x128xf32>
    tpu.vector_store %arg7[%c0_176, %c0_177], %128 {strides = array<i32>} : memref<8x128xf32, #tpu.memory_space<vmem>>, vector<8x128xf32>,
    %c0_178 = arith.constant 0 : index
    %c0_179 = arith.constant 0 : index
    %130 = vector.load %arg7[%c0_178, %c0_179] : memref<8x128xf32, #tpu.memory_space<vmem>>, vector<8x128xf32>
    %c0_180 = arith.constant 0 : index
    %c0_181 = arith.constant 0 : index
    %131 = vector.load %arg4[%c0_180, %c0_181] : memref<8x1xf32, #tpu.memory_space<vmem>>, vector<8x1xf32>
    %132 = vector.broadcast %131 : vector<8x1xf32> to vector<8x128xf32>
    %133 = arith.addf %130, %132 : vector<8x128xf32>
    %c0_182 = arith.constant 0 : index
    %c0_183 = arith.constant 0 : index
    %134 = vector.load %arg5[%c0_182, %c0_183] : memref<1x128xf32, #tpu.memory_space<vmem>>, vector<1x128xf32>
    %135 = vector.broadcast %134 : vector<1x128xf32> to vector<8x128xf32>
    %136 = arith.mulf %133, %135 : vector<8x128xf32>
    %cst_184 = arith.constant dense<0.000000e+00> : vector<8xf32>
    %137 = vector.multi_reduction <add>, %136, %cst_184 [1] : vector<8x128xf32> to vector<8xf32>
    %138 = vector.shape_cast %137 : vector<8xf32> to vector<8x1xf32>
    %139 = arith.mulf %136, %133 : vector<8x128xf32>
    %cst_185 = arith.constant dense<0.000000e+00> : vector<8xf32>
    %140 = vector.multi_reduction <add>, %139, %cst_185 [1] : vector<8x128xf32> to vector<8xf32>
    %141 = vector.shape_cast %140 : vector<8xf32> to vector<8x1xf32>
    %cst_186 = arith.constant 1.562500e-02 : f32
    %142 = vector.broadcast %cst_186 : f32 to vector<8x1xf32>
    %143 = arith.mulf %138, %142 : vector<8x1xf32>
    %cst_187 = arith.constant 1.562500e-02 : f32
    %144 = vector.broadcast %cst_187 : f32 to vector<8x1xf32>
    %145 = arith.mulf %141, %144 : vector<8x1xf32>
    %146 = arith.mulf %143, %143 : vector<8x1xf32>
    %147 = arith.subf %145, %146 : vector<8x1xf32>
    %cst_188 = arith.constant 0.000000e+00 : f32
    %148 = vector.broadcast %cst_188 : f32 to vector<8x1xf32>
    %149 = arith.maximumf %147, %148 : vector<8x1xf32>
    %150 = vector.broadcast %143 : vector<8x1xf32> to vector<8x128xf32>
    %151 = arith.subf %133, %150 : vector<8x128xf32>
    %cst_189 = arith.constant 9.99999974E-6 : f32
    %152 = vector.broadcast %cst_189 : f32 to vector<8x1xf32>
    %153 = arith.addf %149, %152 : vector<8x1xf32>
    %154 = math.rsqrt %153 : vector<8x1xf32>
    %155 = vector.broadcast %154 : vector<8x1xf32> to vector<8x128xf32>
    %156 = arith.mulf %151, %155 : vector<8x128xf32>
    %cst_190 = arith.constant 2.000000e-01 : f32
    %157 = vector.broadcast %cst_190 : f32 to vector<8x128xf32>
    %158 = arith.mulf %157, %156 : vector<8x128xf32>
    %159 = arith.maximumf %156, %158 : vector<8x128xf32>
    %c0_191 = arith.constant 0 : index
    %c0_192 = arith.constant 0 : index
    %c0_193 = arith.constant 0 : index
    %160 = vector.load %arg6[%c0_191, %c0_192, %c0_193] : memref<1x8x128xf32, #tpu.memory_space<vmem>>, vector<1x8x128xf32>
    %161 = vector.shape_cast %160 : vector<1x8x128xf32> to vector<8x128xf32>
    %162 = vector.shape_cast %159 : vector<8x128xf32> to vector<1x8x128xf32>
    tpu.vector_store %arg6[%c0_191, %c0_192, %c0_193], %162 {strides = array<i32>} : memref<1x8x128xf32, #tpu.memory_space<vmem>>, vector<1x8x128xf32>,
    return
  }
  func.func @transform_0(%arg0: i32, %arg1: i32) -> (i32, i32, i32, i32) {
    %c0_i32 = arith.constant 0 : i32
    %c0_i32_0 = arith.constant 0 : i32
    %c0_i32_1 = arith.constant 0 : i32
    %c0_i32_2 = arith.constant 0 : i32
    return %arg0, %c0_i32, %c0_i32_0, %c0_i32_1 : i32, i32, i32, i32
  }
  func.func @transform_1(%arg0: i32, %arg1: i32) -> (i32, i32, i32) {
    %c0_i32 = arith.constant 0 : i32
    %c0_i32_0 = arith.constant 0 : i32
    %c0_i32_1 = arith.constant 0 : i32
    return %c0_i32, %arg1, %c0_i32_0 : i32, i32, i32
  }
  func.func @transform_2(%arg0: i32, %arg1: i32) -> (i32, i32) {
    %c0_i32 = arith.constant 0 : i32
    %c0_i32_0 = arith.constant 0 : i32
    return %arg1, %c0_i32 : i32, i32
  }
  func.func @transform_3(%arg0: i32, %arg1: i32) -> (i32, i32) {
    %c0_i32 = arith.constant 0 : i32
    %c0_i32_0 = arith.constant 0 : i32
    %c0_i32_1 = arith.constant 0 : i32
    return %c0_i32, %c0_i32_0 : i32, i32
  }
  func.func @transform_4(%arg0: i32, %arg1: i32) -> (i32, i32, i32) {
    %c0_i32 = arith.constant 0 : i32
    %c0_i32_0 = arith.constant 0 : i32
    return %arg0, %arg1, %c0_i32 : i32, i32, i32
  }
}

</mosaic_0001>

<llo_original>
// kernel: block_forward.1
$region0: #{block_forward.1}
  #allocation0 [shape = 'u32[]', space=smem, size = 0x4, offset = 0x4, fixed_abs, tag = 'smem constant byte address 0x4 - core index']
  #allocation1 [shape = 'u32[72,128]{1,0:T(1,128)}', space=vmem, size = 0x9000, scoped, tag = 'internal scratch']
  #allocation2 [shape = 'f32[8,128]{1,0:T(8,128)}', space=vmem, size = 0x1000, scoped, tag = 'scratch operand']
  %s0 = inlined_call_operand.vmem [shape: bf16[2,4,8,256], index: 0, kind: input, shape index: {}]
  %s1 = inlined_call_operand.vmem [shape: bf16[16,8,8], index: 1, kind: input, shape index: {}]
  %s2 = inlined_call_operand.vmem [shape: f32[8,1], index: 2, kind: input, shape index: {}]
  %s3 = inlined_call_operand.vmem [shape: f32[1,128], index: 3, kind: input, shape index: {}]
  %s4 = inlined_call_operand.vmem [shape: f32[2,8,128], index: 4, kind: output, shape index: {}]
  %s5 = sld [smem:[#allocation0]]
  $region49: #{block_forward.1} parent=0
    _
  %s7 = ssub.s32 1, %s5
  %s8 = scalar_select 0, %s7, %s5
  loop: start=0, step=1, limit=4
  $region2: #{block_forward.1} parent=0 // loop_pre_header
    _
  $region3: #{block_forward.1} parent=0 // loop_header
    %s10 = sphi 0, %s14
    %p11 = scmp.ge.s32.totalorder %s10, 4
    %s17 = sphi 0, %s29
    %s18 = sphi 0, %s25
    %s19 = sphi 0, %s17
    %s20 = sphi 0, %s18
    %s21 = sphi 0, %s19
    %s22 = sphi 0, %s20
    %s32 = sphi 0, %s34
    %s35 = sphi 0, %s32
    %s36 = sphi 0, %s35
    %s52 = sphi 0, %s36
    %s58 = sphi 0, %s60
    %s61 = sphi 0, %s58
    %s62 = sphi 0, %s61
    %s78 = sphi 0, %s62
    %s84 = sphi 0, %s86
    %s87 = sphi 0, %s84
    %s88 = sphi 0, %s87
    %s104 = sphi 0, %s88
    %s108 = sphi 0, %s108
    %s110 = sphi 0, %s108
    %s111 = sphi 0, %s110
    %s125 = sphi 0, %s111
    %s133 = sphi 0, %s135
    %s136 = sphi 0, %s133
    %s137 = sphi 0, %s136
    %s153 = sphi 0, %s137
  $region4: #{block_forward.1} parent=0 // loop_header_branch
    %13 = sbr.rel (%p11) target = $region8
  $region5: #{block_forward.1} parent=0 // loop_body
    %s15 = ssub.s32 %s10, 1
    %s16 = ssub.s32 %s10, 2
    %s23 = sadd.s32 1, %s18
    %p24 = scmp.ge.s32.totalorder %s23, 1
    %s25 = scalar_select %p24, 0, %s23
    %s26 = sadd.s32 1, %s17
    %s27 = scalar_select %p24, %s26, %s17
    %p28 = scmp.ge.s32.totalorder %s27, 2
    %s29 = scalar_select %p28, 0, %s27
    %s30 = ssub.s32 %s17, %s29
    %p31 = scmp.eq.s32.totalorder %s30, 0
    %s33 = sadd.s32 %s32, 1
    %s34 = scalar_select %p31, %s32, %s33
    %p37 = pneg %p31
    %p38 = scmp.eq.s32.totalorder %s10, 1
    %p39 = por %p37, %p38
    %p40 = scmp.ne.s32.totalorder %s32, %s35
    %p41 = scmp.eq.s32.totalorder %s10, 0
    %p42 = por %p40, %p41
    %p43 = scmp.ne.s32.totalorder %s32, %s35
    %p44 = scmp.eq.s32.totalorder %s15, 1
    %p45 = por %p43, %p44
    %p46 = scmp.ne.s32.totalorder %s35, %s36
    %p47 = scmp.eq.s32.totalorder %s15, 0
    %p48 = por %p46, %p47
    %p49 = scmp.ne.s32.totalorder %s35, %s36
    %p50 = scmp.eq.s32.totalorder %s16, 1
    %p51 = por %p49, %p50
    %p53 = scmp.ne.s32.totalorder %s36, %s52
    %p54 = scmp.eq.s32.totalorder %s16, 0
    %p55 = por %p53, %p54
    %s56 = ssub.s32 %s18, %s25
    %p57 = scmp.eq.s32.totalorder %s56, 0
    %s59 = sadd.s32 %s58, 1
    %s60 = scalar_select %p57, %s58, %s59
    %p63 = pneg %p57
    %p64 = scmp.eq.s32.totalorder %s10, 1
    %p65 = por %p63, %p64
    %p66 = scmp.ne.s32.totalorder %s58, %s61
    %p67 = scmp.eq.s32.totalorder %s10, 0
    %p68 = por %p66, %p67
    %p69 = scmp.ne.s32.totalorder %s58, %s61
    %p70 = scmp.eq.s32.totalorder %s15, 1
    %p71 = por %p69, %p70
    %p72 = scmp.ne.s32.totalorder %s61, %s62
    %p73 = scmp.eq.s32.totalorder %s15, 0
    %p74 = por %p72, %p73
    %p75 = scmp.ne.s32.totalorder %s61, %s62
    %p76 = scmp.eq.s32.totalorder %s16, 1
    %p77 = por %p75, %p76
    %p79 = scmp.ne.s32.totalorder %s62, %s78
    %p80 = scmp.eq.s32.totalorder %s16, 0
    %p81 = por %p79, %p80
    %s82 = ssub.s32 %s18, %s25
    %p83 = scmp.eq.s32.totalorder %s82, 0
    %s85 = sadd.s32 %s84, 1
    %s86 = scalar_select %p83, %s84, %s85
    %p89 = pneg %p83
    %p90 = scmp.eq.s32.totalorder %s10, 1
    %p91 = por %p89, %p90
    %p92 = scmp.ne.s32.totalorder %s84, %s87
    %p93 = scmp.eq.s32.totalorder %s10, 0
    %p94 = por %p92, %p93
    %p95 = scmp.ne.s32.totalorder %s84, %s87
    %p96 = scmp.eq.s32.totalorder %s15, 1
    %p97 = por %p95, %p96
    %p98 = scmp.ne.s32.totalorder %s87, %s88
    %p99 = scmp.eq.s32.totalorder %s15, 0
    %p100 = por %p98, %p99
    %p101 = scmp.ne.s32.totalorder %s87, %s88
    %p102 = scmp.eq.s32.totalorder %s16, 1
    %p103 = por %p101, %p102
    %p105 = scmp.ne.s32.totalorder %s88, %s104
    %p106 = scmp.eq.s32.totalorder %s16, 0
    %p107 = por %p105, %p106
    %s109 = sadd.s32 %s108, 1
    %p112 = scmp.eq.s32.totalorder %s10, 1
    %p113 = scmp.ne.s32.totalorder %s108, %s110
    %p114 = scmp.eq.s32.totalorder %s10, 0
    %p115 = por %p113, %p114
    %p116 = scmp.ne.s32.totalorder %s108, %s110
    %p117 = scmp.eq.s32.totalorder %s15, 1
    %p118 = por %p116, %p117
    %p119 = scmp.ne.s32.totalorder %s110, %s111
    %p120 = scmp.eq.s32.totalorder %s15, 0
    %p121 = por %p119, %p120
    %p122 = scmp.ne.s32.totalorder %s110, %s111
    %p123 = scmp.eq.s32.totalorder %s16, 1
    %p124 = por %p122, %p123
    %p126 = scmp.ne.s32.totalorder %s111, %s125
    %p127 = scmp.eq.s32.totalorder %s16, 0
    %p128 = por %p126, %p127
    %s129 = ssub.s32 %s17, %s29
    %s130 = ssub.s32 %s18, %s25
    %s131 = sor.u32 %s129, %s130
    %p132 = scmp.eq.s32.totalorder %s131, 0
    %s134 = sadd.s32 %s133, 1
    %s135 = scalar_select %p132, %s133, %s134
    %p138 = pneg %p132
    %p139 = scmp.eq.s32.totalorder %s10, 1
    %p140 = por %p138, %p139
    %p141 = scmp.ne.s32.totalorder %s133, %s136
    %p142 = scmp.eq.s32.totalorder %s10, 0
    %p143 = por %p141, %p142
    %p144 = scmp.ne.s32.totalorder %s133, %s136
    %p145 = scmp.eq.s32.totalorder %s15, 1
    %p146 = por %p144, %p145
    %p147 = scmp.ne.s32.totalorder %s136, %s137
    %p148 = scmp.eq.s32.totalorder %s15, 0
    %p149 = por %p147, %p148
    %p150 = scmp.ne.s32.totalorder %s136, %s137
    %p151 = scmp.eq.s32.totalorder %s16, 1
    %p152 = por %p150, %p151
    %p154 = scmp.ne.s32.totalorder %s137, %s153
    %p155 = scmp.eq.s32.totalorder %s16, 0
    %p156 = por %p154, %p155
    %p157 = scmp.le.s32.totalorder 1, %s10
    %p158 = scmp.lt.s32.totalorder %s10, 3
    %p159 = pnand %p157, %p158
    %p160 = pneg %p159
    // Predicated region
    $region9: #{block_forward.1} parent=5 // pred_check
      _
    $region10: #{block_forward.1} parent=5 // pred_check_branch
      %162 = sbr.rel (%p159) target = $region12
    $region11: #{block_forward.1} parent=5 // pred_region
      %s163 = ssub.s32 %s10, 1
      // Predicated region
      $region13: #{block_forward.1} parent=11 // pred_check
        %p164 = pneg %p74
      $region14: #{block_forward.1} parent=11 // pred_check_branch
        %166 = sbr.rel (%p164) target = $region16
      $region15: #{block_forward.1} parent=11 // pred_region
        %p167 = scmp.lt.s32.totalorder %s20, 0
        %s168 = scalar_select %p167, %s20, 0
        %s169 = smul.addr %s168, 4
        %s170 = scalar_lea.vmem %s1, %s169
      $region16: #{block_forward.1} parent=11 // pred_fallthru
        _
      // Predicated region
      $region17: #{block_forward.1} parent=11 // pred_check
        %p171 = pneg %p100
      $region18: #{block_forward.1} parent=11 // pred_check_branch
        %173 = sbr.rel (%p171) target = $region20
      $region19: #{block_forward.1} parent=11 // pred_region
        %p174 = scmp.lt.s32.totalorder %s20, 0
        %s175 = scalar_select %p174, %s20, 0
        %s176 = smul.addr %s175, 8
        %s177 = scalar_lea.vmem %s2, %s176
      $region20: #{block_forward.1} parent=11 // pred_fallthru
        _
      // Predicated region
      $region21: #{block_forward.1} parent=11 // pred_check
        %p178 = pneg %p121
      $region22: #{block_forward.1} parent=11 // pred_check_branch
        %180 = sbr.rel (%p178) target = $region24
      $region23: #{block_forward.1} parent=11 // pred_region
        _
      $region24: #{block_forward.1} parent=11 // pred_fallthru
        _
    $region12: #{block_forward.1} parent=5 // pred_fallthru
      _
    %p181 = scmp.lt.s32.totalorder %s10, 2
    // Predicated region
    $region25: #{block_forward.1} parent=5 // pred_check
      %p182 = pneg %p181
    $region26: #{block_forward.1} parent=5 // pred_check_branch
      %184 = sbr.rel (%p182) target = $region28
    $region27: #{block_forward.1} parent=5 // pred_region
      // Predicated region
      $region29: #{block_forward.1} parent=27 // pred_check
        %p185 = pneg %p42
      $region30: #{block_forward.1} parent=27 // pred_check_branch
        %187 = sbr.rel (%p185) target = $region32
      $region31: #{block_forward.1} parent=27 // pred_region
        %p188 = scmp.lt.s32.totalorder %s17, 1
        %s189 = scalar_select %p188, %s17, 1
        %s190 = smul.addr %s189, 8
        %s191 = smul.addr %s190, 4
        %s192 = scalar_lea.vmem %s0, %s191
      $region32: #{block_forward.1} parent=27 // pred_fallthru
        _
    $region28: #{block_forward.1} parent=5 // pred_fallthru
      _
    %p193 = scmp.le.s32.totalorder 1, %s10
    %p194 = scmp.lt.s32.totalorder %s10, 3
    %p195 = pnand %p193, %p194
    %p196 = pneg %p195
    // Predicated region
    $region33: #{block_forward.1} parent=5 // pred_check
      _
    $region34: #{block_forward.1} parent=5 // pred_check_branch
      %198 = sbr.rel (%p195) target = $region36
    $region35: #{block_forward.1} parent=5 // pred_region
      %s199 = ssub.s32 %s10, 1
      %p200 = scmp.lt.s32.totalorder %s19, 1
      %s201 = scalar_select %p200, %s19, 1
      %s202 = smul.addr %s201, 8
      %s203 = smul.addr %s202, 4
      %s204 = scalar_lea.vmem %s0, %s203
      %p205 = pneg %p48
      %p206 = pneg %p45
      %p207 = scmp.lt.s32.totalorder %s20, 0
      %s208 = scalar_select %p207, %s20, 0
      %s209 = smul.addr %s208, 4
      %s210 = scalar_lea.vmem %s1, %s209
      %p211 = pneg %p74
      %p212 = pneg %p71
      %p213 = scmp.lt.s32.totalorder %s20, 0
      %s214 = scalar_select %p213, %s20, 0
      %s215 = smul.addr %s214, 8
      %s216 = scalar_lea.vmem %s2, %s215
      %p217 = pneg %p100
      %p218 = pneg %p97
      %p219 = pneg %p121
      %p220 = pneg %p118
      %p221 = pneg %p149
      %p222 = pneg %p146
      %p223 = scmp.lt.s32.totalorder %s19, 1
      %s224 = scalar_select %p223, %s19, 1
      %p225 = scmp.lt.s32.totalorder %s20, 0
      %s226 = scalar_select %p225, %s20, 0
      %s227 = sadd.s32 %s226, %s224
      %s228 = smul.addr %s227, 8
      %s229 = scalar_lea.vmem %s4, %s228
      %p230 = scmp.lt.s32.totalorder %s19, 1
      %s231 = scalar_select %p230, %s19, 1
      %s232 = smul.addr %s231, 8
      %s233 = smul.addr %s232, 4
      %s234 = scalar_lea.vmem %s0, %s233
      %p235 = scmp.lt.s32.totalorder %s20, 0
      %s236 = scalar_select %p235, %s20, 0
      %s237 = smul.addr %s236, 4
      %s238 = scalar_lea.vmem %s1, %s237
      %p239 = scmp.lt.s32.totalorder %s20, 0
      %s240 = scalar_select %p239, %s20, 0
      %s241 = smul.addr %s240, 8
      %s242 = scalar_lea.vmem %s2, %s241
      %p243 = scmp.lt.s32.totalorder %s19, 1
      %s244 = scalar_select %p243, %s19, 1
      %p245 = scmp.lt.s32.totalorder %s20, 0
      %s246 = scalar_select %p245, %s20, 0
      %s247 = sadd.s32 %s246, %s244
      %s248 = smul.addr %s247, 8
      %s249 = scalar_lea.vmem %s4, %s248
      %251 = vst [vmem:[#allocation2] sm:$0xff] 0.0
      %v252 = vld [vmem:[%s234] sm:$0xf]
      %v253 = vld [vmem:[%s238] sm:$0xf]
      %v254 = vld [vmem:[#allocation2] sm:$0xff]
      %vm255 = vcmask 64512
      %v257 = vsel %vm255, %v253, 0
      %vm259 = vcmask 1043456
      %v261 = vsel %vm259, %v252, 0
      %263 = vmatpush.bf16.msra.mxu0 0
      %264 = vmatpush.bf16.msra.mxu0 0
      %265 = vmatpush.bf16.msra.mxu0 0
      %266 = vmatpush.bf16.msra.mxu0 0
      %267 = vmatpush.bf16.msra.mxu0 0
      %268 = vmatpush.bf16.msra.mxu0 0
      %269 = vmatpush.bf16.msra.mxu0 0
      %270 = vmatpush.bf16.msra.mxu0 %v261
      %271 = vmatmul.bf16.gmra.mxu0 %v257
      %v272 = vpop.f32.mrf.mxu0
      %v273 = vadd.f32 0.0, %v272
      %v274 = vpop.f32.mrf.mxu0
      %275 = vdwg.mxu0
      %v276 = vadd.f32 %v254, %v273
      %277 = vst [vmem:[#allocation2] sm:$0xff] %v276
      %s278 = scalar_lea.vmem %s234, 8
      %v279 = vld [vmem:[%s278] sm:$0xf]
      %s280 = scalar_lea.vmem %s238, 4
      %v281 = vld [vmem:[%s280] sm:$0xf]
      %v282 = vld [vmem:[#allocation2] sm:$0xff]
      %v284 = vsel %vm255, %v281, 0
      %v287 = vsel %vm259, %v279, 0
      %289 = vmatpush.bf16.msra.mxu0 0
      %290 = vmatpush.bf16.msra.mxu0 0
      %291 = vmatpush.bf16.msra.mxu0 0
      %292 = vmatpush.bf16.msra.mxu0 0
      %293 = vmatpush.bf16.msra.mxu0 0
      %294 = vmatpush.bf16.msra.mxu0 0
      %295 = vmatpush.bf16.msra.mxu0 0
      %296 = vmatpush.bf16.msra.mxu0 %v287
      %297 = vmatmul.bf16.gmra.mxu0 %v284
      %v298 = vpop.f32.mrf.mxu0
      %v299 = vadd.f32 0.0, %v298
      %v300 = vpop.f32.mrf.mxu0
      %301 = vdwg.mxu0
      %v302 = vadd.f32 %v282, %v299
      %303 = vst [vmem:[#allocation2] sm:$0xff] %v302
      %v304 = vld [vmem:[%s234] sm:$0xff]
      %s305 = scalar_lea.vmem %s238, 8
      %v306 = vld [vmem:[%s305] sm:$0xf]
      %v307 = vld [vmem:[#allocation2] sm:$0xff]
      %v309 = vunpack.c.l.b16 %v304
      %v310 = vunpack.c.h.b16 %v304
      %v311 = vpack.c.b16 %v309, %v309
      %v312 = vpack.c.b16 %v310, %v310
      %313 = vrot.lane.b32.xlu0 %v311, 127
      %v314 = vpop.permute.xlu0 %313
      %315 = vrot.lane.b32.xlu0 %v312, 127
      %v316 = vpop.permute.xlu0 %315
      %vm317 = vcmask 1039360
      %v318 = vsel %vm317, %v314, %v316
      %v320 = vsel %vm255, %v306, 0
      %v323 = vsel %vm259, %v318, 0
      %325 = vmatpush.bf16.msra.mxu0 0
      %326 = vmatpush.bf16.msra.mxu0 0
      %327 = vmatpush.bf16.msra.mxu0 0
      %328 = vmatpush.bf16.msra.mxu0 0
      %329 = vmatpush.bf16.msra.mxu0 0
      %330 = vmatpush.bf16.msra.mxu0 0
      %331 = vmatpush.bf16.msra.mxu0 0
      %332 = vmatpush.bf16.msra.mxu0 %v323
      %333 = vmatmul.bf16.gmra.mxu0 %v320
      %v334 = vpop.f32.mrf.mxu0
      %v335 = vadd.f32 0.0, %v334
      %v336 = vpop.f32.mrf.mxu0
      %337 = vdwg.mxu0
      %v338 = vadd.f32 %v307, %v335
      %339 = vst [vmem:[#allocation2] sm:$0xff] %v338
      %v340 = vld [vmem:[%s278] sm:$0xff]
      %s341 = scalar_lea.vmem %s238, 12
      %v342 = vld [vmem:[%s341] sm:$0xf]
      %v343 = vld [vmem:[#allocation2] sm:$0xff]
      %v345 = vunpack.c.l.b16 %v340
      %v346 = vunpack.c.h.b16 %v340
      %v347 = vpack.c.b16 %v345, %v345
      %v348 = vpack.c.b16 %v346, %v346
      %349 = vrot.lane.b32.xlu0 %v347, 127
      %v350 = vpop.permute.xlu0 %349
      %351 = vrot.lane.b32.xlu0 %v348, 127
      %v352 = vpop.permute.xlu0 %351
      %v353 = vsel %vm317, %v350, %v352
      %v355 = vsel %vm255, %v342, 0
      %v358 = vsel %vm259, %v353, 0
      %360 = vmatpush.bf16.msra.mxu0 0
      %361 = vmatpush.bf16.msra.mxu0 0
      %362 = vmatpush.bf16.msra.mxu0 0
      %363 = vmatpush.bf16.msra.mxu0 0
      %364 = vmatpush.bf16.msra.mxu0 0
      %365 = vmatpush.bf16.msra.mxu0 0
      %366 = vmatpush.bf16.msra.mxu0 0
      %367 = vmatpush.bf16.msra.mxu0 %v358
      %368 = vmatmul.bf16.gmra.mxu0 %v355
      %v369 = vpop.f32.mrf.mxu0
      %v370 = vadd.f32 0.0, %v369
      %v371 = vpop.f32.mrf.mxu0
      %372 = vdwg.mxu0
      %v373 = vadd.f32 %v343, %v370
      %374 = vst [vmem:[#allocation2] sm:$0xff] %v373
      %s375 = scalar_lea.vmem %s234, 16
      %v376 = vld [vmem:[%s375] sm:$0xf]
      %s377 = scalar_lea.vmem %s238, 16
      %v378 = vld [vmem:[%s377] sm:$0xf]
      %v379 = vld [vmem:[#allocation2] sm:$0xff]
      %v381 = vsel %vm255, %v378, 0
      %v384 = vsel %vm259, %v376, 0
      %386 = vmatpush.bf16.msra.mxu0 0
      %387 = vmatpush.bf16.msra.mxu0 0
      %388 = vmatpush.bf16.msra.mxu0 0
      %389 = vmatpush.bf16.msra.mxu0 0
      %390 = vmatpush.bf16.msra.mxu0 0
      %391 = vmatpush.bf16.msra.mxu0 0
      %392 = vmatpush.bf16.msra.mxu0 0
      %393 = vmatpush.bf16.msra.mxu0 %v384
      %394 = vmatmul.bf16.gmra.mxu0 %v381
      %v395 = vpop.f32.mrf.mxu0
      %v396 = vadd.f32 0.0, %v395
      %v397 = vpop.f32.mrf.mxu0
      %398 = vdwg.mxu0
      %v399 = vadd.f32 %v379, %v396
      %400 = vst [vmem:[#allocation2] sm:$0xff] %v399
      %s401 = scalar_lea.vmem %s234, 24
      %v402 = vld [vmem:[%s401] sm:$0xf]
      %s403 = scalar_lea.vmem %s238, 20
      %v404 = vld [vmem:[%s403] sm:$0xf]
      %v405 = vld [vmem:[#allocation2] sm:$0xff]
      %v407 = vsel %vm255, %v404, 0
      %v410 = vsel %vm259, %v402, 0
      %412 = vmatpush.bf16.msra.mxu0 0
      %413 = vmatpush.bf16.msra.mxu0 0
      %414 = vmatpush.bf16.msra.mxu0 0
      %415 = vmatpush.bf16.msra.mxu0 0
      %416 = vmatpush.bf16.msra.mxu0 0
      %417 = vmatpush.bf16.msra.mxu0 0
      %418 = vmatpush.bf16.msra.mxu0 0
      %419 = vmatpush.bf16.msra.mxu0 %v410
      %420 = vmatmul.bf16.gmra.mxu0 %v407
      %v421 = vpop.f32.mrf.mxu0
      %v422 = vadd.f32 0.0, %v421
      %v423 = vpop.f32.mrf.mxu0
      %424 = vdwg.mxu0
      %v425 = vadd.f32 %v405, %v422
      %426 = vst [vmem:[#allocation2] sm:$0xff] %v425
      %v427 = vld [vmem:[%s375] sm:$0xff]
      %s428 = scalar_lea.vmem %s238, 24
      %v429 = vld [vmem:[%s428] sm:$0xf]
      %v430 = vld [vmem:[#allocation2] sm:$0xff]
      %v432 = vunpack.c.l.b16 %v427
      %v433 = vunpack.c.h.b16 %v427
      %v434 = vpack.c.b16 %v432, %v432
      %v435 = vpack.c.b16 %v433, %v433
      %436 = vrot.lane.b32.xlu0 %v434, 127
      %v437 = vpop.permute.xlu0 %436
      %438 = vrot.lane.b32.xlu0 %v435, 127
      %v439 = vpop.permute.xlu0 %438
      %v440 = vsel %vm317, %v437, %v439
      %v442 = vsel %vm255, %v429, 0
      %v445 = vsel %vm259, %v440, 0
      %447 = vmatpush.bf16.msra.mxu0 0
      %448 = vmatpush.bf16.msra.mxu0 0
      %449 = vmatpush.bf16.msra.mxu0 0
      %450 = vmatpush.bf16.msra.mxu0 0
      %451 = vmatpush.bf16.msra.mxu0 0
      %452 = vmatpush.bf16.msra.mxu0 0
      %453 = vmatpush.bf16.msra.mxu0 0
      %454 = vmatpush.bf16.msra.mxu0 %v445
      %455 = vmatmul.bf16.gmra.mxu0 %v442
      %v456 = vpop.f32.mrf.mxu0
      %v457 = vadd.f32 0.0, %v456
      %v458 = vpop.f32.mrf.mxu0
      %459 = vdwg.mxu0
      %v460 = vadd.f32 %v430, %v457
      %461 = vst [vmem:[#allocation2] sm:$0xff] %v460
      %v462 = vld [vmem:[%s401] sm:$0xff]
      %s463 = scalar_lea.vmem %s238, 28
      %v464 = vld [vmem:[%s463] sm:$0xf]
      %v465 = vld [vmem:[#allocation2] sm:$0xff]
      %v467 = vunpack.c.l.b16 %v462
      %v468 = vunpack.c.h.b16 %v462
      %v469 = vpack.c.b16 %v467, %v467
      %v470 = vpack.c.b16 %v468, %v468
      %471 = vrot.lane.b32.xlu0 %v469, 127
      %v472 = vpop.permute.xlu0 %471
      %473 = vrot.lane.b32.xlu0 %v470, 127
      %v474 = vpop.permute.xlu0 %473
      %v475 = vsel %vm317, %v472, %v474
      %v477 = vsel %vm255, %v464, 0
      %v480 = vsel %vm259, %v475, 0
      %482 = vmatpush.bf16.msra.mxu0 0
      %483 = vmatpush.bf16.msra.mxu0 0
      %484 = vmatpush.bf16.msra.mxu0 0
      %485 = vmatpush.bf16.msra.mxu0 0
      %486 = vmatpush.bf16.msra.mxu0 0
      %487 = vmatpush.bf16.msra.mxu0 0
      %488 = vmatpush.bf16.msra.mxu0 0
      %489 = vmatpush.bf16.msra.mxu0 %v480
      %490 = vmatmul.bf16.gmra.mxu0 %v477
      %v491 = vpop.f32.mrf.mxu0
      %v492 = vadd.f32 0.0, %v491
      %v493 = vpop.f32.mrf.mxu0
      %494 = vdwg.mxu0
      %v495 = vadd.f32 %v465, %v492
      %496 = vst [vmem:[#allocation2] sm:$0xff] %v495
      %v497 = vld [vmem:[%s234] sm:$0xff]
      %s498 = scalar_lea.vmem %s238, 32
      %v499 = vld [vmem:[%s498] sm:$0xf]
      %v500 = vld [vmem:[#allocation2] sm:$0xff]
      %v502 = vunpack.c.l.b16 %v497
      %v503 = vunpack.c.h.b16 %v497
      %v504 = vpack.c.b16 %v502, %v502
      %v505 = vpack.c.b16 %v503, %v503
      %506 = vrot.lane.b32.xlu0 %v504, 119
      %v507 = vpop.permute.xlu0 %506
      %508 = vrot.lane.b32.xlu0 %v505, 119
      %v509 = vpop.permute.xlu0 %508
      %vm510 = vcmask 973824
      %v511 = vsel %vm510, %v507, %v509
      %v513 = vsel %vm255, %v499, 0
      %v516 = vsel %vm259, %v511, 0
      %518 = vmatpush.bf16.msra.mxu0 0
      %519 = vmatpush.bf16.msra.mxu0 0
      %520 = vmatpush.bf16.msra.mxu0 0
      %521 = vmatpush.bf16.msra.mxu0 0
      %522 = vmatpush.bf16.msra.mxu0 0
      %523 = vmatpush.bf16.msra.mxu0 0
      %524 = vmatpush.bf16.msra.mxu0 0
      %525 = vmatpush.bf16.msra.mxu0 %v516
      %526 = vmatmul.bf16.gmra.mxu0 %v513
      %v527 = vpop.f32.mrf.mxu0
      %v528 = vadd.f32 0.0, %v527
      %v529 = vpop.f32.mrf.mxu0
      %530 = vdwg.mxu0
      %v531 = vadd.f32 %v500, %v528
      %532 = vst [vmem:[#allocation2] sm:$0xff] %v531
      %v533 = vld [vmem:[%s278] sm:$0xff]
      %s534 = scalar_lea.vmem %s238, 36
      %v535 = vld [vmem:[%s534] sm:$0xf]
      %v536 = vld [vmem:[#allocation2] sm:$0xff]
      %v538 = vunpack.c.l.b16 %v533
      %v539 = vunpack.c.h.b16 %v533
      %v540 = vpack.c.b16 %v538, %v538
      %v541 = vpack.c.b16 %v539, %v539
      %542 = vrot.lane.b32.xlu0 %v540, 119
      %v543 = vpop.permute.xlu0 %542
      %544 = vrot.lane.b32.xlu0 %v541, 119
      %v545 = vpop.permute.xlu0 %544
      %v546 = vsel %vm510, %v543, %v545
      %v548 = vsel %vm255, %v535, 0
      %v551 = vsel %vm259, %v546, 0
      %553 = vmatpush.bf16.msra.mxu0 0
      %554 = vmatpush.bf16.msra.mxu0 0
      %555 = vmatpush.bf16.msra.mxu0 0
      %556 = vmatpush.bf16.msra.mxu0 0
      %557 = vmatpush.bf16.msra.mxu0 0
      %558 = vmatpush.bf16.msra.mxu0 0
      %559 = vmatpush.bf16.msra.mxu0 0
      %560 = vmatpush.bf16.msra.mxu0 %v551
      %561 = vmatmul.bf16.gmra.mxu0 %v548
      %v562 = vpop.f32.mrf.mxu0
      %v563 = vadd.f32 0.0, %v562
      %v564 = vpop.f32.mrf.mxu0
      %565 = vdwg.mxu0
      %v566 = vadd.f32 %v536, %v563
      %567 = vst [vmem:[#allocation2] sm:$0xff] %v566
      %v568 = vld [vmem:[%s234] sm:$0xff]
      %s569 = scalar_lea.vmem %s238, 40
      %v570 = vld [vmem:[%s569] sm:$0xf]
      %v571 = vld [vmem:[#allocation2] sm:$0xff]
      %v573 = vunpack.c.l.b16 %v568
      %v574 = vunpack.c.h.b16 %v568
      %v575 = vpack.c.b16 %v573, %v573
      %v576 = vpack.c.b16 %v574, %v574
      %577 = vrot.lane.b32.xlu0 %v575, 118
      %v578 = vpop.permute.xlu0 %577
      %579 = vrot.lane.b32.xlu0 %v576, 118
      %v580 = vpop.permute.xlu0 %579
      %vm581 = vcmask 965632
      %v582 = vsel %vm581, %v578, %v580
      %v584 = vsel %vm255, %v570, 0
      %v587 = vsel %vm259, %v582, 0
      %589 = vmatpush.bf16.msra.mxu0 0
      %590 = vmatpush.bf16.msra.mxu0 0
      %591 = vmatpush.bf16.msra.mxu0 0
      %592 = vmatpush.bf16.msra.mxu0 0
      %593 = vmatpush.bf16.msra.mxu0 0
      %594 = vmatpush.bf16.msra.mxu0 0
      %595 = vmatpush.bf16.msra.mxu0 0
      %596 = vmatpush.bf16.msra.mxu0 %v587
      %597 = vmatmul.bf16.gmra.mxu0 %v584
      %v598 = vpop.f32.mrf.mxu0
      %v599 = vadd.f32 0.0, %v598
      %v600 = vpop.f32.mrf.mxu0
      %601 = vdwg.mxu0
      %v602 = vadd.f32 %v571, %v599
      %603 = vst [vmem:[#allocation2] sm:$0xff] %v602
      %v604 = vld [vmem:[%s278] sm:$0xff]
      %s605 = scalar_lea.vmem %s238, 44
      %v606 = vld [vmem:[%s605] sm:$0xf]
      %v607 = vld [vmem:[#allocation2] sm:$0xff]
      %v609 = vunpack.c.l.b16 %v604
      %v610 = vunpack.c.h.b16 %v604
      %v611 = vpack.c.b16 %v609, %v609
      %v612 = vpack.c.b16 %v610, %v610
      %613 = vrot.lane.b32.xlu0 %v611, 118
      %v614 = vpop.permute.xlu0 %613
      %615 = vrot.lane.b32.xlu0 %v612, 118
      %v616 = vpop.permute.xlu0 %615
      %v617 = vsel %vm581, %v614, %v616
      %v619 = vsel %vm255, %v606, 0
      %v622 = vsel %vm259, %v617, 0
      %624 = vmatpush.bf16.msra.mxu0 0
      %625 = vmatpush.bf16.msra.mxu0 0
      %626 = vmatpush.bf16.msra.mxu0 0
      %627 = vmatpush.bf16.msra.mxu0 0
      %628 = vmatpush.bf16.msra.mxu0 0
      %629 = vmatpush.bf16.msra.mxu0 0
      %630 = vmatpush.bf16.msra.mxu0 0
      %631 = vmatpush.bf16.msra.mxu0 %v622
      %632 = vmatmul.bf16.gmra.mxu0 %v619
      %v633 = vpop.f32.mrf.mxu0
      %v634 = vadd.f32 0.0, %v633
      %v635 = vpop.f32.mrf.mxu0
      %636 = vdwg.mxu0
      %v637 = vadd.f32 %v607, %v634
      %638 = vst [vmem:[#allocation2] sm:$0xff] %v637
      %v639 = vld [vmem:[%s375] sm:$0xff]
      %s640 = scalar_lea.vmem %s238, 48
      %v641 = vld [vmem:[%s640] sm:$0xf]
      %v642 = vld [vmem:[#allocation2] sm:$0xff]
      %v644 = vunpack.c.l.b16 %v639
      %v645 = vunpack.c.h.b16 %v639
      %v646 = vpack.c.b16 %v644, %v644
      %v647 = vpack.c.b16 %v645, %v645
      %648 = vrot.lane.b32.xlu0 %v646, 119
      %v649 = vpop.permute.xlu0 %648
      %650 = vrot.lane.b32.xlu0 %v647, 119
      %v651 = vpop.permute.xlu0 %650
      %v652 = vsel %vm510, %v649, %v651
      %v654 = vsel %vm255, %v641, 0
      %v657 = vsel %vm259, %v652, 0
      %659 = vmatpush.bf16.msra.mxu0 0
      %660 = vmatpush.bf16.msra.mxu0 0
      %661 = vmatpush.bf16.msra.mxu0 0
      %662 = vmatpush.bf16.msra.mxu0 0
      %663 = vmatpush.bf16.msra.mxu0 0
      %664 = vmatpush.bf16.msra.mxu0 0
      %665 = vmatpush.bf16.msra.mxu0 0
      %666 = vmatpush.bf16.msra.mxu0 %v657
      %667 = vmatmul.bf16.gmra.mxu0 %v654
      %v668 = vpop.f32.mrf.mxu0
      %v669 = vadd.f32 0.0, %v668
      %v670 = vpop.f32.mrf.mxu0
      %671 = vdwg.mxu0
      %v672 = vadd.f32 %v642, %v669
      %673 = vst [vmem:[#allocation2] sm:$0xff] %v672
      %v674 = vld [vmem:[%s401] sm:$0xff]
      %s675 = scalar_lea.vmem %s238, 52
      %v676 = vld [vmem:[%s675] sm:$0xf]
      %v677 = vld [vmem:[#allocation2] sm:$0xff]
      %v679 = vunpack.c.l.b16 %v674
      %v680 = vunpack.c.h.b16 %v674
      %v681 = vpack.c.b16 %v679, %v679
      %v682 = vpack.c.b16 %v680, %v680
      %683 = vrot.lane.b32.xlu0 %v681, 119
      %v684 = vpop.permute.xlu0 %683
      %685 = vrot.lane.b32.xlu0 %v682, 119
      %v686 = vpop.permute.xlu0 %685
      %v687 = vsel %vm510, %v684, %v686
      %v689 = vsel %vm255, %v676, 0
      %v692 = vsel %vm259, %v687, 0
      %694 = vmatpush.bf16.msra.mxu0 0
      %695 = vmatpush.bf16.msra.mxu0 0
      %696 = vmatpush.bf16.msra.mxu0 0
      %697 = vmatpush.bf16.msra.mxu0 0
      %698 = vmatpush.bf16.msra.mxu0 0
      %699 = vmatpush.bf16.msra.mxu0 0
      %700 = vmatpush.bf16.msra.mxu0 0
      %701 = vmatpush.bf16.msra.mxu0 %v692
      %702 = vmatmul.bf16.gmra.mxu0 %v689
      %v703 = vpop.f32.mrf.mxu0
      %v704 = vadd.f32 0.0, %v703
      %v705 = vpop.f32.mrf.mxu0
      %706 = vdwg.mxu0
      %v707 = vadd.f32 %v677, %v704
      %708 = vst [vmem:[#allocation2] sm:$0xff] %v707
      %v709 = vld [vmem:[%s375] sm:$0xff]
      %s710 = scalar_lea.vmem %s238, 56
      %v711 = vld [vmem:[%s710] sm:$0xf]
      %v712 = vld [vmem:[#allocation2] sm:$0xff]
      %v714 = vunpack.c.l.b16 %v709
      %v715 = vunpack.c.h.b16 %v709
      %v716 = vpack.c.b16 %v714, %v714
      %v717 = vpack.c.b16 %v715, %v715
      %718 = vrot.lane.b32.xlu0 %v716, 118
      %v719 = vpop.permute.xlu0 %718
      %720 = vrot.lane.b32.xlu0 %v717, 118
      %v721 = vpop.permute.xlu0 %720
      %v722 = vsel %vm581, %v719, %v721
      %v724 = vsel %vm255, %v711, 0
      %v727 = vsel %vm259, %v722, 0
      %729 = vmatpush.bf16.msra.mxu0 0
      %730 = vmatpush.bf16.msra.mxu0 0
      %731 = vmatpush.bf16.msra.mxu0 0
      %732 = vmatpush.bf16.msra.mxu0 0
      %733 = vmatpush.bf16.msra.mxu0 0
      %734 = vmatpush.bf16.msra.mxu0 0
      %735 = vmatpush.bf16.msra.mxu0 0
      %736 = vmatpush.bf16.msra.mxu0 %v727
      %737 = vmatmul.bf16.gmra.mxu0 %v724
      %v738 = vpop.f32.mrf.mxu0
      %v739 = vadd.f32 0.0, %v738
      %v740 = vpop.f32.mrf.mxu0
      %741 = vdwg.mxu0
      %v742 = vadd.f32 %v712, %v739
      %743 = vst [vmem:[#allocation2] sm:$0xff] %v742
      %v744 = vld [vmem:[%s401] sm:$0xff]
      %s745 = scalar_lea.vmem %s238, 60
      %v746 = vld [vmem:[%s745] sm:$0xf]
      %v747 = vld [vmem:[#allocation2] sm:$0xff]
      %v749 = vunpack.c.l.b16 %v744
      %v750 = vunpack.c.h.b16 %v744
      %v751 = vpack.c.b16 %v749, %v749
      %v752 = vpack.c.b16 %v750, %v750
      %753 = vrot.lane.b32.xlu0 %v751, 118
      %v754 = vpop.permute.xlu0 %753
      %755 = vrot.lane.b32.xlu0 %v752, 118
      %v756 = vpop.permute.xlu0 %755
      %v757 = vsel %vm581, %v754, %v756
      %v759 = vsel %vm255, %v746, 0
      %v762 = vsel %vm259, %v757, 0
      %764 = vmatpush.bf16.msra.mxu0 0
      %765 = vmatpush.bf16.msra.mxu0 0
      %766 = vmatpush.bf16.msra.mxu0 0
      %767 = vmatpush.bf16.msra.mxu0 0
      %768 = vmatpush.bf16.msra.mxu0 0
      %769 = vmatpush.bf16.msra.mxu0 0
      %770 = vmatpush.bf16.msra.mxu0 0
      %771 = vmatpush.bf16.msra.mxu0 %v762
      %772 = vmatmul.bf16.gmra.mxu0 %v759
      %v773 = vpop.f32.mrf.mxu0
      %v774 = vadd.f32 0.0, %v773
      %v775 = vpop.f32.mrf.mxu0
      %776 = vdwg.mxu0
      %v777 = vadd.f32 %v747, %v774
      %778 = vst [vmem:[#allocation2] sm:$0xff] %v777
      %v779 = vld [vmem:[#allocation2] sm:$0xff]
      %v780 = vld [vmem:[%s242] sm:$0xff]
      %782 = vset.pattern.permute.xlu0 0
      %783 = vperm.xlu0 %782, %v780
      %v784 = vpop.permute.xlu0 %783
      %v786 = vadd.f32 %v779, %v784
      %v787 = vld [vmem:[%s3] sm:$0x1]
      %v789 = vperm.slane %v787, 0
      %v791 = vmul.f32 %v786, %v789
      %792 = vadd.xlane.f32.xlu0 %v791
      %v793 = vpop.xlane.xlu0 %792
      %v794 = vmul.f32 %v791, %v786
      %795 = vadd.xlane.f32.xlu0 %v794
      %v796 = vpop.xlane.xlu0 %795
      %v797 = vmul.f32 %v793, 0.015625
      %v798 = vmul.f32 %v796, 0.015625
      %v799 = vmul.f32 %v797, %v797
      %v800 = vsub.f32 %v798, %v799
      %v801 = vmax.f32 %v800, 0.0
      %v802 = vsub.f32 %v786, %v797
      %v803 = vadd.f32 %v801, 1e-05
      %v804 = vrsqrt.pop %v803
      %v805 = vmul.f32 %v804, %v803
      %v806 = vmul.f32 %v805, %v804
      %v807 = vmul.f32 0.5, %v806
      %v808 = vsub.f32 1.5, %v807
      %v809 = vmul.f32 %v804, %v808
      %vm810 = vweird.f32 %v803
      %vm811 = vweird.f32 %v804
      %vm812 = vmor %vm810, %vm811
      %v813 = vsel %vm812, %v804, %v809
      %v814 = vmul.f32 %v802, %v813
      %v815 = vmul.f32 %v814, 0.2
      %v816 = vmax.f32 %v814, %v815
      %817 = vst [vmem:[%s249] sm:$0xff] %v816
      %p818 = scmp.lt.s32.totalorder %s19, 1
      %s819 = scalar_select %p818, %s19, 1
      %p820 = scmp.lt.s32.totalorder %s20, 0
      %s821 = scalar_select %p820, %s20, 0
      %s822 = sadd.s32 %s821, %s819
      %s823 = smul.addr %s822, 8
      %s824 = scalar_lea.vmem %s4, %s823
      // Predicated region
      $region37: #{block_forward.1} parent=35 // pred_check
        %p825 = pneg %p146
      $region38: #{block_forward.1} parent=35 // pred_check_branch
        %827 = sbr.rel (%p825) target = $region40
      $region39: #{block_forward.1} parent=35 // pred_region
        _
      $region40: #{block_forward.1} parent=35 // pred_fallthru
        _
    $region36: #{block_forward.1} parent=5 // pred_fallthru
      _
    %p828 = scmp.le.s32.totalorder 2, %s10
    // Predicated region
    $region41: #{block_forward.1} parent=5 // pred_check
      %p829 = pneg %p828
    $region42: #{block_forward.1} parent=5 // pred_check_branch
      %831 = sbr.rel (%p829) target = $region44
    $region43: #{block_forward.1} parent=5 // pred_region
      %s832 = ssub.s32 %s10, 2
      // Predicated region
      $region45: #{block_forward.1} parent=43 // pred_check
        %p833 = pneg %p152
      $region46: #{block_forward.1} parent=43 // pred_check_branch
        %835 = sbr.rel (%p833) target = $region48
      $region47: #{block_forward.1} parent=43 // pred_region
        %p836 = scmp.lt.s32.totalorder %s21, 1
        %s837 = scalar_select %p836, %s21, 1
        %p838 = scmp.lt.s32.totalorder %s22, 0
        %s839 = scalar_select %p838, %s22, 0
        %s840 = sadd.s32 %s839, %s837
        %s841 = smul.addr %s840, 8
        %s842 = scalar_lea.vmem %s4, %s841
      $region48: #{block_forward.1} parent=43 // pred_fallthru
        _
    $region44: #{block_forward.1} parent=5 // pred_fallthru
      _
  $region6: #{block_forward.1} parent=0 // loop_footer
    %s14 = sadd.s32 1, %s10
  $region7: #{block_forward.1} parent=0 // loop_footer_branch
    %9 = sbr.rel target = $region3
  $region8: #{block_forward.1} parent=0 // loop_exit
    _

</llo_original>
